<compile_context>
chip_gen: v6e
topology: v6e:2x2x1
jax: 0.10.0
libtpu: 0.0.40
codegen_flags: <defaults>
</compile_context>

<pallas_src>
import functools

import numpy as np
import jax
import jax.numpy as jnp
from jax.experimental import pallas as pl
from jax.experimental.pallas import tpu as pltpu


def _canny_kernel(x_ref, o_ref, *, H, W):
    """Fused reflect-pad + depthwise Sobel-V/H + magnitude.

    The block holds several image planes packed as (P*H, g*W); plane
    boundaries along both axes are handled with modular masks so shifted
    neighbours never leak across planes.
    """
    x = x_ref[...]                                          # (P*H, g*W) f32
    ncol = x.shape[1]
    row = jax.lax.broadcasted_iota(jnp.int32, x.shape, 0) % H
    col = jax.lax.broadcasted_iota(jnp.int32, x.shape, 1) % W

    # ---- vertical 3-tap (sublane shifts), reflect at y==0 / y==H-1 --------
    up0 = jnp.concatenate([x[:1], x[:-1]], axis=0)          # x[y-1] (raw shift)
    dn0 = jnp.concatenate([x[1:], x[-1:]], axis=0)          # x[y+1] (raw shift)
    up = jnp.where(row == 0, dn0, up0)                      # x[-1] -> x[1]
    dn = jnp.where(row == H - 1, up0, dn0)                  # x[H]  -> x[H-2]
    sm = up + 2.0 * x + dn                                  # taps [ 1, 2, 1] over y
    df = up - dn                                            # taps [ 1, 0,-1] over y

    # ---- horizontal 3-tap (XLU lane rolls), reflect at x==0 / x==W-1 ------
    left_edge = col == 0
    right_edge = col == W - 1

    sm_l0 = pltpu.roll(sm, shift=1, axis=1)                 # sm[x-1] (wraps)
    sm_r0 = pltpu.roll(sm, shift=ncol - 1, axis=1)          # sm[x+1] (wraps)
    df_l0 = pltpu.roll(df, shift=1, axis=1)
    df_r0 = pltpu.roll(df, shift=ncol - 1, axis=1)

    sm_l = jnp.where(left_edge, sm_r0, sm_l0)               # reflect fixups
    sm_r = jnp.where(right_edge, sm_l0, sm_r0)
    df_l = jnp.where(left_edge, df_r0, df_l0)
    df_r = jnp.where(right_edge, df_l0, df_r0)

    gv = sm_r - sm_l                                        # taps [-1, 0, 1] over x
    gh = df_l + 2.0 * df + df_r                             # taps [ 1, 2, 1] over x
    o_ref[...] = jnp.sqrt(gv * gv + gh * gh)


def canny(x: jax.Array) -> jax.Array:
    """x: (B, C, H, W) float32 (NCHW, like the PyTorch module, C=4)."""
    B, C, H, W = x.shape
    if H < 2 or W < 2:
        raise ValueError("ReflectionPad2d(1) requires H >= 2 and W >= 2")
    n = B * C
    x = x.astype(jnp.float32)

    # ---- lane packing: put g planes side-by-side so stores are lane-dense --
    if W >= 128:
        g = 1
    else:
        divisors = [d for d in range(1, n + 1) if n % d == 0]
        dense = [d for d in divisors if d * W >= 128]
        g = min(dense) if dense else max(divisors)
    G = n // g                      # number of plane-groups
    Wp = g * W                      # packed lane width

    # (B,C,H,W) -> (G, g, H, W) -> (G, H, g, W) -> (G*H, g*W)   (layout plumbing)
    xp = x.reshape(G, g, H, W).transpose(0, 2, 1, 3).reshape(G * H, Wp)

    # ---- groups per grid step: ~0.5-1 MiB blocks, prefer an even grid ------
    group_bytes = H * Wp * 4
    p_max = int(max(1, min(G, (1 << 19) // max(group_bytes, 1))))

    def legal(p):
        # block second-minor dim must be a multiple of 8 or the full extent
        return G % p == 0 and ((p * H) % 8 == 0 or p == G)

    cand = [p for p in range(1, p_max + 1) if legal(p)]
    even = [p for p in cand if (G // p) % 2 == 0]   # keep both v7x TCs busy
    if even:
        P = max(even)
    elif cand:
        P = max(cand)
    else:
        P = G                                        # whole array: always legal
    grid = G // P
    block = (P * H, Wp)
    block_bytes = block[0] * block[1] * 4

    params = dict(dimension_semantics=("parallel",))
    if block_bytes * 16 > (16 << 20):                # only for unusually big blocks
        params["vmem_limit_bytes"] = min(64 << 20, block_bytes * 16)
    # TODO(synk): for very large single planes, add H-tiling with a +-1 row
    # halo instead of whole-plane blocks to keep blocks in the 0.5-2 MiB range.

    out = pl.pallas_call(
        functools.partial(_canny_kernel, H=H, W=W),
        out_shape=jax.ShapeDtypeStruct((G * H, Wp), jnp.float32),
        grid=(grid,),
        in_specs=[pl.BlockSpec(block, lambda i: (i, 0))],
        out_specs=pl.BlockSpec(block, lambda i: (i, 0)),
        compiler_params=pltpu.CompilerParams(**params),
    )(xp)

    return out.reshape(G, H, g, W).transpose(0, 2, 1, 3).reshape(B, C, H, W)


def canny_reference(x: jax.Array) -> jax.Array:
    """Pure-JAX reference: reflect pad + direct 9-tap depthwise conv."""
    kv = jnp.asarray([[-1., 0., 1.], [-2., 0., 2.], [-1., 0., 1.]], jnp.float32)
    kh = jnp.asarray([[1., 2., 1.], [0., 0., 0.], [-1., -2., -1.]], jnp.float32)
    H, W = x.shape[-2:]
    xp = jnp.pad(x, ((0, 0), (0, 0), (1, 1), (1, 1)), mode="reflect")
    gv = jnp.zeros_like(x)
    gh = jnp.zeros_like(x)
    for dy in range(3):
        for dx in range(3):
            win = xp[..., dy:dy + H, dx:dx + W]
            gv = gv + kv[dy, dx] * win
            gh = gh + kh[dy, dx] * win
    return jnp.sqrt(gv * gv + gh * gh)


if __name__ == "__main__":
    key = jax.random.PRNGKey(0)
    # Matches the PyTorch module: NCHW with 4 channels (Conv2d(4, 4, 3)).
    x = jax.random.uniform(key, (2, 4, 16, 16), dtype=jnp.float32)

    out = jax.jit(canny)(x)
    jax.block_until_ready(out)

    ref = canny_reference(x)
    assert out.shape == x.shape
    assert bool(jnp.all(jnp.isfinite(out)))
    np.testing.assert_allclose(np.asarray(out), np.asarray(ref),
                               rtol=1e-5, atol=1e-5)
    print("KERNEL_OK")
</pallas_src>

<mosaic_0001>
module attributes {stable_mosaic.version = 11 : i64} {
  func.func @_canny_kernel(%arg0: i32, %arg1: memref<16x128xf32, #tpu.memory_space<vmem>>, %arg2: memref<16x128xf32, #tpu.memory_space<vmem>>) attributes {dimension_semantics = [#tpu.dimension_semantics<parallel>], iteration_bounds = array<i64: 1>, scalar_prefetch = 0 : i64, scratch_operands = 0 : i64, tpu.core_type = #tpu.core_type<tc>, window_params = [{transform_indices = @transform_0, window_bounds = array<i64: 16, 128>}, {transform_indices = @transform_1, window_bounds = array<i64: 16, 128>}]} {
    %c0 = arith.constant 0 : index
    %c0_0 = arith.constant 0 : index
    %0 = vector.load %arg1[%c0, %c0_0] : memref<16x128xf32, #tpu.memory_space<vmem>>, vector<16x128xf32>
    %1 = tpu.iota {dimensions = array<i32: 0>} : vector<16x128xi32>
    %c16_i32 = arith.constant 16 : i32
    %c0_i32 = arith.constant 0 : i32
    %2 = arith.cmpi eq, %c16_i32, %c0_i32 : i32
    %c1_i32 = arith.constant 1 : i32
    %3 = arith.select %2, %c1_i32, %c16_i32 : i32
    %4 = vector.broadcast %3 : i32 to vector<16x128xi32>
    %5 = arith.remsi %1, %4 : vector<16x128xi32>
    %c0_i32_1 = arith.constant 0 : i32
    %6 = vector.broadcast %c0_i32_1 : i32 to vector<16x128xi32>
    %7 = arith.cmpi ne, %5, %6 : vector<16x128xi32>
    %c0_i32_2 = arith.constant 0 : i32
    %8 = vector.broadcast %c0_i32_2 : i32 to vector<16x128xi32>
    %9 = arith.cmpi slt, %5, %8 : vector<16x128xi32>
    %c0_i32_3 = arith.constant 0 : i32
    %10 = arith.cmpi slt, %3, %c0_i32_3 : i32
    %11 = vector.broadcast %10 : i1 to vector<16x128xi1>
    %12 = vector.broadcast %11 : vector<16x128xi1> to vector<16x128xi1>
    %13 = arith.xori %9, %12 : vector<16x128xi1>
    %14 = arith.andi %13, %7 : vector<16x128xi1>
    %15 = vector.broadcast %3 : i32 to vector<16x128xi32>
    %16 = arith.addi %5, %15 : vector<16x128xi32>
    %17 = arith.select %14, %16, %5 : vector<16x128xi1>, vector<16x128xi32>
    %18 = tpu.iota {dimensions = array<i32: 1>} : vector<16x128xi32>
    %c16_i32_4 = arith.constant 16 : i32
    %c0_i32_5 = arith.constant 0 : i32
    %19 = arith.cmpi eq, %c16_i32_4, %c0_i32_5 : i32
    %c1_i32_6 = arith.constant 1 : i32
    %20 = arith.select %19, %c1_i32_6, %c16_i32_4 : i32
    %21 = vector.broadcast %20 : i32 to vector<16x128xi32>
    %22 = arith.remsi %18, %21 : vector<16x128xi32>
    %c0_i32_7 = arith.constant 0 : i32
    %23 = vector.broadcast %c0_i32_7 : i32 to vector<16x128xi32>
    %24 = arith.cmpi ne, %22, %23 : vector<16x128xi32>
    %c0_i32_8 = arith.constant 0 : i32
    %25 = vector.broadcast %c0_i32_8 : i32 to vector<16x128xi32>
    %26 = arith.cmpi slt, %22, %25 : vector<16x128xi32>
    %c0_i32_9 = arith.constant 0 : i32
    %27 = arith.cmpi slt, %20, %c0_i32_9 : i32
    %28 = vector.broadcast %27 : i1 to vector<16x128xi1>
    %29 = vector.broadcast %28 : vector<16x128xi1> to vector<16x128xi1>
    %30 = arith.xori %26, %29 : vector<16x128xi1>
    %31 = arith.andi %30, %24 : vector<16x128xi1>
    %32 = vector.broadcast %20 : i32 to vector<16x128xi32>
    %33 = arith.addi %22, %32 : vector<16x128xi32>
    %34 = arith.select %31, %33, %22 : vector<16x128xi1>, vector<16x128xi32>
    %35 = vector.extract_strided_slice %0 {offsets = [0, 0], sizes = [1, 128], strides = [1, 1]} : vector<16x128xf32> to vector<1x128xf32>
    %36 = vector.extract_strided_slice %0 {offsets = [0, 0], sizes = [15, 128], strides = [1, 1]} : vector<16x128xf32> to vector<15x128xf32>
    %37 = tpu.concatenate %35, %36 in 0 : vector<1x128xf32>, vector<15x128xf32> -> vector<16x128xf32>
    %38 = vector.extract_strided_slice %0 {offsets = [1, 0], sizes = [15, 128], strides = [1, 1]} : vector<16x128xf32> to vector<15x128xf32>
    %39 = vector.extract_strided_slice %0 {offsets = [15, 0], sizes = [1, 128], strides = [1, 1]} : vector<16x128xf32> to vector<1x128xf32>
    %40 = tpu.concatenate %38, %39 in 0 : vector<15x128xf32>, vector<1x128xf32> -> vector<16x128xf32>
    %c0_i32_10 = arith.constant 0 : i32
    %41 = vector.broadcast %c0_i32_10 : i32 to vector<16x128xi32>
    %42 = arith.cmpi eq, %17, %41 : vector<16x128xi32>
    %43 = arith.select %42, %40, %37 : vector<16x128xi1>, vector<16x128xf32>
    %c15_i32 = arith.constant 15 : i32
    %44 = vector.broadcast %c15_i32 : i32 to vector<16x128xi32>
    %45 = arith.cmpi eq, %17, %44 : vector<16x128xi32>
    %46 = arith.select %45, %37, %40 : vector<16x128xi1>, vector<16x128xf32>
    %cst = arith.constant 2.000000e+00 : f32
    %47 = vector.broadcast %cst : f32 to vector<16x128xf32>
    %48 = arith.mulf %47, %0 : vector<16x128xf32>
    %49 = arith.addf %43, %48 : vector<16x128xf32>
    %50 = arith.addf %49, %46 : vector<16x128xf32>
    %51 = arith.subf %43, %46 : vector<16x128xf32>
    %c0_i32_11 = arith.constant 0 : i32
    %52 = vector.broadcast %c0_i32_11 : i32 to vector<16x128xi32>
    %53 = arith.cmpi eq, %34, %52 : vector<16x128xi32>
    %c15_i32_12 = arith.constant 15 : i32
    %54 = vector.broadcast %c15_i32_12 : i32 to vector<16x128xi32>
    %55 = arith.cmpi eq, %34, %54 : vector<16x128xi32>
    %c1_i32_13 = arith.constant 1 : i32
    %56 = tpu.dynamic_rotate %50 by %c1_i32_13 dim 1 : vector<16x128xf32>, i32 -> vector<16x128xf32>
    %c127_i32 = arith.constant 127 : i32
    %57 = tpu.dynamic_rotate %50 by %c127_i32 dim 1 : vector<16x128xf32>, i32 -> vector<16x128xf32>
    %c1_i32_14 = arith.constant 1 : i32
    %58 = tpu.dynamic_rotate %51 by %c1_i32_14 dim 1 : vector<16x128xf32>, i32 -> vector<16x128xf32>
    %c127_i32_15 = arith.constant 127 : i32
    %59 = tpu.dynamic_rotate %51 by %c127_i32_15 dim 1 : vector<16x128xf32>, i32 -> vector<16x128xf32>
    %60 = arith.select %53, %57, %56 : vector<16x128xi1>, vector<16x128xf32>
    %61 = arith.select %55, %56, %57 : vector<16x128xi1>, vector<16x128xf32>
    %62 = arith.select %53, %59, %58 : vector<16x128xi1>, vector<16x128xf32>
    %63 = arith.select %55, %58, %59 : vector<16x128xi1>, vector<16x128xf32>
    %64 = arith.subf %61, %60 : vector<16x128xf32>
    %cst_16 = arith.constant 2.000000e+00 : f32
    %65 = vector.broadcast %cst_16 : f32 to vector<16x128xf32>
    %66 = arith.mulf %65, %51 : vector<16x128xf32>
    %67 = arith.addf %62, %66 : vector<16x128xf32>
    %68 = arith.addf %67, %63 : vector<16x128xf32>
    %69 = arith.mulf %64, %64 : vector<16x128xf32>
    %70 = arith.mulf %68, %68 : vector<16x128xf32>
    %71 = arith.addf %69, %70 : vector<16x128xf32>
    %72 = math.sqrt %71 : vector<16x128xf32>
    %c0_17 = arith.constant 0 : index
    %c0_18 = arith.constant 0 : index
    %73 = vector.load %arg2[%c0_17, %c0_18] : memref<16x128xf32, #tpu.memory_space<vmem>>, vector<16x128xf32>
    tpu.vector_store %arg2[%c0_17, %c0_18], %72 {strides = array<i32>} : memref<16x128xf32, #tpu.memory_space<vmem>>, vector<16x128xf32>,
    return
  }
  func.func @transform_0(%arg0: i32) -> (i32, i32) {
    %c0_i32 = arith.constant 0 : i32
    %c0_i32_0 = arith.constant 0 : i32
    return %arg0, %c0_i32 : i32, i32
  }
  func.func @transform_1(%arg0: i32) -> (i32, i32) {
    %c0_i32 = arith.constant 0 : i32
    %c0_i32_0 = arith.constant 0 : i32
    return %arg0, %c0_i32 : i32, i32
  }
}

</mosaic_0001>

<llo_original>
// kernel: canny.1
$region0: #{canny.1}
  #allocation0 [shape = 'u32[]', space=smem, size = 0x4, offset = 0x4, fixed_abs, tag = 'smem constant byte address 0x4 - core index']
  #allocation1 [shape = 'u32[144,128]{1,0:T(1,128)}', space=vmem, size = 0x12000, scoped, tag = 'internal scratch']
  %s0 = inlined_call_operand.vmem [shape: f32[16,128], index: 0, kind: input, shape index: {}]
  %s1 = inlined_call_operand.vmem [shape: f32[16,128], index: 1, kind: output, shape index: {}]
  %s2 = sld [smem:[#allocation0]]
  $region14: #{canny.1} parent=0
    _
  %s4 = ssub.s32 1, %s2
  %s5 = scalar_select 0, %s4, %s2
  // Predicated region
  $region2: #{canny.1} parent=0 // pred_check
    _
  $region3: #{canny.1} parent=0 // pred_check_branch
    %7 = sbr.rel (0) target = $region5
  $region4: #{canny.1} parent=0 // pred_region
    _
  $region5: #{canny.1} parent=0 // pred_fallthru
    _
  %v8 = vld [vmem:[%s0] sm:$0xff]
  %v9 = vld [vmem:[%s0 + $0x8] sm:$0xff]
  %v10 = vlaneseq
  %v11 = vshrl.u32 %v10, 7
  %v12 = vadd.s32 %v11, 8
  %vm13 = vcmp.lt.s32.totalorder %v11, 0
  %v14 = vsub.s32 0, %v11
  %v15 = vsel %vm13, %v14, %v11
  %v16 = vshrl.u32 %v15, 4
  %v17 = vand.u32 %v15, 15
  %v18 = vsub.s32 0, %v17
  %v19 = vsel %vm13, %v18, %v17
  %vm20 = vcmp.lt.s32.totalorder %v12, 0
  %v21 = vsub.s32 0, %v12
  %v22 = vsel %vm20, %v21, %v12
  %v23 = vshrl.u32 %v22, 4
  %v24 = vand.u32 %v22, 15
  %v25 = vsub.s32 0, %v24
  %v26 = vsel %vm20, %v25, %v24
  %vm27 = vcmp.ne.s32.totalorder %v19, 0
  %vm28 = vcmp.ne.s32.totalorder %v26, 0
  %vm29 = vcmp.lt.s32.totalorder %v19, 0
  %vm30 = vcmp.lt.s32.totalorder %v26, 0
  %vm31 = vmand %vm29, %vm27
  %vm32 = vmand %vm30, %vm28
  %v33 = vadd.s32 %v19, 16
  %v34 = vadd.s32 %v26, 16
  %v35 = vsel %vm31, %v33, %v19
  %v36 = vsel %vm32, %v34, %v26
  %v37 = vlaneseq
  %v38 = vand.u32 %v37, 127
  %vm39 = vcmp.lt.s32.totalorder %v38, 0
  %v40 = vsub.s32 0, %v38
  %v41 = vsel %vm39, %v40, %v38
  %v42 = vshrl.u32 %v41, 4
  %v43 = vand.u32 %v41, 15
  %v44 = vsub.s32 0, %v43
  %v45 = vsel %vm39, %v44, %v43
  %vm46 = vcmp.ne.s32.totalorder %v45, 0
  %vm47 = vcmp.lt.s32.totalorder %v45, 0
  %vm48 = vmand %vm47, %vm46
  %v49 = vadd.s32 %v45, 16
  %v50 = vsel %vm48, %v49, %v45
  %vm53 = vcmask 1040384
  %v54 = vrot.slane %v8, 7
  %v55 = vrot.slane %v9, 7
  %v56 = vsel %vm53, %v54, %v55
  %v59 = vsel %vm53, %v8, %v54
  %vm60 = vcmask 1046528
  %v61 = vrot.slane %v8, 1
  %v62 = vrot.slane %v9, 1
  %v63 = vsel %vm60, %v61, %v62
  %v66 = vsel %vm60, %v62, %v9
  %vm67 = vcmp.eq.s32.totalorder %v35, 0
  %vm68 = vcmp.eq.s32.totalorder %v36, 0
  %v69 = vsel %vm67, %v63, %v59
  %v70 = vsel %vm68, %v66, %v56
  %vm71 = vcmp.eq.s32.totalorder %v35, 15
  %vm72 = vcmp.eq.s32.totalorder %v36, 15
  %v73 = vsel %vm71, %v59, %v63
  %v74 = vsel %vm72, %v56, %v66
  %v75 = vmul.f32 %v8, 2.0
  %v76 = vmul.f32 %v9, 2.0
  %v77 = vadd.f32 %v69, %v75
  %v78 = vadd.f32 %v70, %v76
  %v79 = vadd.f32 %v77, %v73
  %v80 = vadd.f32 %v78, %v74
  %v81 = vsub.f32 %v69, %v73
  %v82 = vsub.f32 %v70, %v74
  %vm83 = vcmp.eq.s32.totalorder %v50, 0
  %vm84 = vcmp.eq.s32.totalorder %v50, 15
  %85 = vrot.lane.b32.xlu0 %v79, 1
  %v86 = vpop.permute.xlu0 %85
  %87 = vrot.lane.b32.xlu0 %v80, 1
  %v88 = vpop.permute.xlu0 %87
  %89 = vrot.lane.b32.xlu0 %v79, 127
  %v90 = vpop.permute.xlu0 %89
  %91 = vrot.lane.b32.xlu0 %v80, 127
  %v92 = vpop.permute.xlu0 %91
  %93 = vrot.lane.b32.xlu0 %v81, 1
  %v94 = vpop.permute.xlu0 %93
  %95 = vrot.lane.b32.xlu0 %v82, 1
  %v96 = vpop.permute.xlu0 %95
  %97 = vrot.lane.b32.xlu0 %v81, 127
  %v98 = vpop.permute.xlu0 %97
  %99 = vrot.lane.b32.xlu0 %v82, 127
  %v100 = vpop.permute.xlu0 %99
  %v101 = vsel %vm83, %v90, %v86
  %v102 = vsel %vm83, %v92, %v88
  %v103 = vsel %vm84, %v86, %v90
  %v104 = vsel %vm84, %v88, %v92
  %v105 = vsel %vm83, %v98, %v94
  %v106 = vsel %vm83, %v100, %v96
  %v107 = vsel %vm84, %v94, %v98
  %v108 = vsel %vm84, %v96, %v100
  %v109 = vsub.f32 %v103, %v101
  %v110 = vsub.f32 %v104, %v102
  %v111 = vmul.f32 %v81, 2.0
  %v112 = vmul.f32 %v82, 2.0
  %v113 = vadd.f32 %v105, %v111
  %v114 = vadd.f32 %v106, %v112
  %v115 = vadd.f32 %v113, %v107
  %v116 = vadd.f32 %v114, %v108
  %v117 = vmul.f32 %v109, %v109
  %v118 = vmul.f32 %v110, %v110
  %v119 = vmul.f32 %v115, %v115
  %v120 = vmul.f32 %v116, %v116
  %v121 = vadd.f32 %v117, %v119
  %v122 = vadd.f32 %v118, %v120
  %v123 = vrsqrt.pop %v121
  %v124 = vmul.f32 %v121, %v123
  %vm125 = vcmp.eq.f32.partialorder %v121, inf
  %v126 = vsel %vm125, %v121, %v124
  %vm127 = vcmp.eq.f32.partialorder %v121, 0.0
  %v128 = vand.u32 %v121, 2147483648
  %v129 = vsel %vm127, %v128, %v126
  %v130 = vrsqrt.pop %v122
  %v131 = vmul.f32 %v122, %v130
  %vm132 = vcmp.eq.f32.partialorder %v122, inf
  %v133 = vsel %vm132, %v122, %v131
  %vm134 = vcmp.eq.f32.partialorder %v122, 0.0
  %v135 = vand.u32 %v122, 2147483648
  %v136 = vsel %vm134, %v135, %v133
  %137 = vst [vmem:[%s1] sm:$0xff] %v129
  %138 = vst [vmem:[%s1 + $0x8] sm:$0xff] %v136
  // Predicated region
  $region6: #{canny.1} parent=0 // pred_check
    _
  $region7: #{canny.1} parent=0 // pred_check_branch
    %140 = sbr.rel (0) target = $region9
  $region8: #{canny.1} parent=0 // pred_region
    _
  $region9: #{canny.1} parent=0 // pred_fallthru
    _
  // Predicated region
  $region10: #{canny.1} parent=0 // pred_check
    _
  $region11: #{canny.1} parent=0 // pred_check_branch
    %142 = sbr.rel (0) target = $region13
  $region12: #{canny.1} parent=0 // pred_region
    _
  $region13: #{canny.1} parent=0 // pred_fallthru
    _

</llo_original>
